<compile_context>
chip_gen: v5e
topology: v5e:2x2
jax: 0.10.0
libtpu: 0.0.40
codegen_flags: <defaults>
</compile_context>

<pallas_src>
import functools

import numpy as np
import jax
import jax.numpy as jnp
from jax import lax
from jax.experimental import pallas as pl
from jax.experimental.pallas import tpu as pltpu

_VMEM_LIMIT_BYTES = 32 * 1024 * 1024      # scoped-VMEM limit; well below v7x's 64 MiB physical
_BLOCK_BUDGET_BYTES = 12 * 1024 * 1024    # double-buffered in+out blocks per pallas_call
_UNROLL_LIMIT = 64                        # static unroll threshold for the in-kernel row loop


def _compiler_params():
    return pltpu.CompilerParams(dimension_semantics=("parallel",),
                                vmem_limit_bytes=_VMEM_LIMIT_BYTES)


def _pick_block_rows(n_rows, bytes_per_row):
    """Rows of the flattened leading axis per grid step, sized for double-buffered VMEM."""
    t = max(1, _BLOCK_BUDGET_BYTES // max(1, 2 * bytes_per_row))
    if t >= n_rows:
        if n_rows >= 16:
            # split into >= 2 grid steps so the 'parallel' axis can shard across v7x's 2 TCs
            t = ((n_rows + 1) // 2 + 7) // 8 * 8
        else:
            t = n_rows
    else:
        t = max(8, (t // 8) * 8)
    return int(min(t, n_rows))


def _selection_matrix(size, stride, dtype):
    """Exact 0/1 selection matrix (size, size//stride) picking indices off + k*stride."""
    off = size % stride
    osize = size // stride
    cols = off + stride * np.arange(osize)
    sel = (np.arange(size)[:, None] == cols[None, :]).astype(np.dtype(dtype))
    return jnp.asarray(sel)


# ----------------------------------------------------------------------------------------------
# Kernels
# ----------------------------------------------------------------------------------------------

def _stride_rows_kernel(x_ref, o_ref, *, off, stride, n_rows):
    """Stride the second-to-last axis of a (TP, S, Post) block: pure strided row copy (no MXU)."""
    def copy_row(i):
        o_ref[:, i, :] = x_ref[:, off + i * stride, :]

    if n_rows <= _UNROLL_LIMIT:
        for i in range(n_rows):
            copy_row(i)
    else:
        def body(i, carry):
            copy_row(i)
            return carry
        lax.fori_loop(0, n_rows, body, 0)


def _stride_lanes_kernel(s_ref, x_ref, o_ref):
    """Stride the last (lane) axis of a (TM, S) block via an exact 0/1 selection matmul."""
    o_ref[...] = jnp.dot(x_ref[...], s_ref[...],
                         preferred_element_type=jnp.float32).astype(o_ref.dtype)


def _stride_last_two_kernel(s_ref, x_ref, o_ref, *, off_h, stride_h, n_rows):
    """Stride the last two axes of a (TM, H, W) block.

    H (sublane) striding = cheap indexed row reads; W (lane) striding = exact 0/1 selection matmul.
    """
    sel = s_ref[...]

    def do_row(h):
        row = x_ref[:, off_h + h * stride_h, :]                                  # (TM, W)
        o_ref[:, h, :] = jnp.dot(row, sel,
                                 preferred_element_type=jnp.float32).astype(o_ref.dtype)

    if n_rows <= _UNROLL_LIMIT:
        for h in range(n_rows):
            do_row(h)
    else:
        def body(h, carry):
            do_row(h)
            return carry
        lax.fori_loop(0, n_rows, body, 0)


# ----------------------------------------------------------------------------------------------
# Wrappers (reshape-only layout plumbing around pallas_call; never transpose in HBM)
# ----------------------------------------------------------------------------------------------

def _stride_last_two_dims_pallas(x, stride_h, stride_w):
    """x[..., off_h::stride_h, off_w::stride_w] for the two trailing dims, in one kernel."""
    if stride_h == 1 and stride_w == 1:
        return x
    *lead, H, W = x.shape
    off_h, oH = H % stride_h, H // stride_h
    oW = W // stride_w
    M = int(np.prod(lead)) if lead else 1
    x3 = x.reshape(M, H, W)                                   # free reshape (row-major)
    itemsize = jnp.dtype(x.dtype).itemsize
    TM = _pick_block_rows(M, (H * W + oH * oW) * itemsize)
    sel = _selection_matrix(W, stride_w, x.dtype)
    kernel = functools.partial(_stride_last_two_kernel,
                               off_h=off_h, stride_h=stride_h, n_rows=oH)
    out = pl.pallas_call(
        kernel,
        out_shape=jax.ShapeDtypeStruct((M, oH, oW), x.dtype),
        grid=(pl.cdiv(M, TM),),
        in_specs=[pl.BlockSpec((W, oW), lambda i: (0, 0)),
                  pl.BlockSpec((TM, H, W), lambda i: (i, 0, 0))],
        out_specs=pl.BlockSpec((TM, oH, oW), lambda i: (i, 0, 0)),
        compiler_params=_compiler_params(),
    )(sel, x3)
    return out.reshape(tuple(lead) + (oH, oW))


def _stride_single_dim_pallas(x, dim, stride):
    """x[..., off::stride, ...] along a single dim (dedicated 1-axis kernels)."""
    if stride == 1:
        return x
    shape = x.shape
    ndim = x.ndim
    S = shape[dim]
    off, oS = S % stride, S // stride
    itemsize = jnp.dtype(x.dtype).itemsize

    if dim == ndim - 1:
        # Strided axis sits on lanes -> exact 0/1 selection matmul on 2-D (TM, S) blocks.
        M = int(np.prod(shape[:-1]))
        x2 = x.reshape(M, S)
        TM = _pick_block_rows(M, (S + oS) * itemsize)
        sel = _selection_matrix(S, stride, x.dtype)
        out = pl.pallas_call(
            _stride_lanes_kernel,
            out_shape=jax.ShapeDtypeStruct((M, oS), x.dtype),
            grid=(pl.cdiv(M, TM),),
            in_specs=[pl.BlockSpec((S, oS), lambda i: (0, 0)),
                      pl.BlockSpec((TM, S), lambda i: (i, 0))],
            out_specs=pl.BlockSpec((TM, oS), lambda i: (i, 0)),
            compiler_params=_compiler_params(),
        )(sel, x2)
        return out.reshape(shape[:-1] + (oS,))

    # Strided axis is non-minor -> pure strided row copy; the lane axis (Post) stays dense.
    pre = int(np.prod(shape[:dim]))
    post = int(np.prod(shape[dim + 1:]))
    x3 = x.reshape(pre, S, post)
    TP = _pick_block_rows(pre, (S + oS) * post * itemsize)
    kernel = functools.partial(_stride_rows_kernel, off=off, stride=stride, n_rows=oS)
    out = pl.pallas_call(
        kernel,
        out_shape=jax.ShapeDtypeStruct((pre, oS, post), x.dtype),
        grid=(pl.cdiv(pre, TP),),
        in_specs=[pl.BlockSpec((TP, S, post), lambda i: (i, 0, 0))],
        out_specs=pl.BlockSpec((TP, oS, post), lambda i: (i, 0, 0)),
        compiler_params=_compiler_params(),
    )(x3)
    return out.reshape(shape[:dim] + (oS,) + shape[dim + 1:])


# ----------------------------------------------------------------------------------------------
# Module (plain python dicts iterated in sorted-key order stand in for SortedDict)
# ----------------------------------------------------------------------------------------------

def _extract_size_from_dict_of_dicts(dod):
    for dk in sorted(dod):
        for k in sorted(dod[dk]):
            return dod[dk][k].shape
    return None


class ShootingStridingBlock:
    """JAX/Pallas re-implementation of neuro_shooting.striding_block.ShootingStridingBlock."""

    def __init__(self, stride, stride_dims):
        if type(stride_dims) == int:
            self.stride_dims = tuple([stride_dims])
        elif type(stride_dims) == tuple:
            self.stride_dims = stride_dims
        elif type(stride_dims) == list:
            self.stride_dims = tuple(stride_dims)
        else:
            raise ValueError('Unsupported stride dim type {}.'.format(type(stride_dims)))

        nr_of_stride_dims = len(self.stride_dims)
        if type(stride) == int:
            self.stride = tuple([stride] * nr_of_stride_dims)
        elif type(stride) == tuple:
            if len(stride) != nr_of_stride_dims:
                raise ValueError('Stride tuple needs to be of the same dimension as the striding dims.')
            self.stride = stride
        elif type(stride) == list:
            if len(stride) != nr_of_stride_dims:
                raise ValueError('Stride list needs to be of the same dimension as the striding dims.')
            self.stride = tuple(stride)
        else:
            raise ValueError('Unsupported stride type {}.'.format(type(stride)))

    # --- tensor-level striding ---

    def _stride_tensor_multiple_dimensions(self, x, stride, stride_dims, stride_dim_offset=0):
        dims = [d + stride_dim_offset for d in stride_dims]
        strides = list(stride)
        ndim = x.ndim
        for d in dims:
            if d > ndim - 1:
                raise ValueError(
                    'Dimension mismatch. Stride dimension is too large. Expected stride dimension '
                    'at most {}, but got {}.'.format(ndim - 1, d))
            if d < 2:
                raise ValueError('Striding in batch or channel dimension is not supported.')
        cur = x
        i = 0
        while i < len(dims):
            # Striding distinct axes commutes with the original's sequential slicing, so the common
            # "(H, W) = last two dims" pair is fused into a single kernel call.
            fuse = (i + 1 < len(dims)
                    and dims[i] != dims[i + 1]
                    and {dims[i], dims[i + 1]} == {ndim - 2, ndim - 1})
            if fuse:
                if dims[i] == ndim - 2:
                    s_h, s_w = strides[i], strides[i + 1]
                else:
                    s_h, s_w = strides[i + 1], strides[i]
                cur = _stride_last_two_dims_pallas(cur, s_h, s_w)
                i += 2
            else:
                cur = _stride_single_dim_pallas(cur, dims[i], strides[i])
                i += 1
        return cur

    # --- dict plumbing ---

    def _stride_dict(self, generic_dict, stride, stride_dims, stride_dim_offset):
        ret = {}
        for k in sorted(generic_dict):
            ret[k] = self._stride_tensor_multiple_dimensions(
                generic_dict[k], stride=stride, stride_dims=stride_dims,
                stride_dim_offset=stride_dim_offset)
        return ret

    def _stride_dict_of_dicts(self, generic_dict_of_dicts, stride=None, stride_dims=None,
                              stride_dim_offset=0):
        ret = {}
        for dk in sorted(generic_dict_of_dicts):
            ret[dk] = self._stride_dict(generic_dict_of_dicts[dk], stride=stride,
                                        stride_dims=stride_dims,
                                        stride_dim_offset=stride_dim_offset)
        return ret

    def forward(self, state_dict_of_dicts=None, costate_dict_of_dicts=None, data_dict_of_dicts=None):
        strided_state = self._stride_dict_of_dicts(state_dict_of_dicts,
                                                   stride=self.stride, stride_dims=self.stride_dims)
        strided_costate = self._stride_dict_of_dicts(costate_dict_of_dicts,
                                                     stride=self.stride, stride_dims=self.stride_dims)
        sz_state = _extract_size_from_dict_of_dicts(state_dict_of_dicts)
        sz_data = _extract_size_from_dict_of_dicts(data_dict_of_dicts)
        stride_dim_offset = len(sz_data) - len(sz_state)
        strided_data = self._stride_dict_of_dicts(data_dict_of_dicts,
                                                  stride=self.stride, stride_dims=self.stride_dims,
                                                  stride_dim_offset=stride_dim_offset)
        return strided_state, strided_costate, strided_data


if __name__ == "__main__":
    key = jax.random.PRNGKey(0)
    k1, k2, k3, k4, k5, k6 = jax.random.split(key, 6)

    B, C, H, W = 2, 4, 16, 16
    state = {"block1": {
        "q1": jax.random.normal(k1, (B, C, H, W), jnp.float32),
        "q2": jax.random.normal(k2, (B, C, H, W), jnp.float32),
        # non-divisible spatial sizes exercise the offset = size % stride convention
        "q3": jax.random.normal(k3, (B, C, 17, 12), jnp.float32),
    }}
    costate = {"block1": {
        "p_q1": jax.random.normal(k4, (B, C, H, W), jnp.float32),
        "p_q2": jax.random.normal(k5, (B, C, H, W), jnp.float32),
    }}
    # data has one extra dim -> stride_dim_offset = 1 (dims (2,3) map to (3,4) for the data)
    data = {"block1": {"x": jax.random.normal(k6, (B, C, 3, H, W), jnp.float32)}}

    # --- main path: stride the two trailing spatial dims (fused last-two-dims kernel) ---
    block = ShootingStridingBlock(stride=2, stride_dims=(2, 3))
    s_state, s_costate, s_data = block.forward(state_dict_of_dicts=state,
                                               costate_dict_of_dicts=costate,
                                               data_dict_of_dicts=data)
    jax.block_until_ready((s_state, s_costate, s_data))

    assert s_state["block1"]["q1"].shape == (B, C, H // 2, W // 2)
    assert s_state["block1"]["q3"].shape == (B, C, 8, 6)
    assert s_data["block1"]["x"].shape == (B, C, 3, H // 2, W // 2)
    assert bool(jnp.array_equal(s_state["block1"]["q1"], state["block1"]["q1"][:, :, 0::2, 0::2]))
    assert bool(jnp.array_equal(s_state["block1"]["q3"], state["block1"]["q3"][:, :, 1::2, 0::2]))
    assert bool(jnp.array_equal(s_costate["block1"]["p_q2"], costate["block1"]["p_q2"][:, :, 0::2, 0::2]))
    assert bool(jnp.array_equal(s_data["block1"]["x"], data["block1"]["x"][:, :, :, 0::2, 0::2]))

    # --- single-dim paths: dedicated 1-axis kernels (no identity-matmul partner axis) ---
    block_h = ShootingStridingBlock(stride=2, stride_dims=2)       # non-minor axis -> pure strided copy
    h_state, _, h_data = block_h.forward(state, costate, data)
    jax.block_until_ready((h_state, h_data))
    assert bool(jnp.array_equal(h_state["block1"]["q1"], state["block1"]["q1"][:, :, 0::2, :]))
    assert bool(jnp.array_equal(h_state["block1"]["q3"], state["block1"]["q3"][:, :, 1::2, :]))
    assert bool(jnp.array_equal(h_data["block1"]["x"], data["block1"]["x"][:, :, :, 0::2, :]))

    block_w = ShootingStridingBlock(stride=[3], stride_dims=[3])   # lane axis -> selection matmul
    w_state, _, w_data = block_w.forward(state, costate, data)
    jax.block_until_ready((w_state, w_data))
    assert bool(jnp.array_equal(w_state["block1"]["q1"], state["block1"]["q1"][:, :, :, 1::3]))  # 16 % 3 = 1
    assert bool(jnp.array_equal(w_state["block1"]["q3"], state["block1"]["q3"][:, :, :, 0::3]))  # 12 % 3 = 0
    assert bool(jnp.array_equal(w_data["block1"]["x"], data["block1"]["x"][:, :, :, :, 1::3]))

    print("KERNEL_OK")
</pallas_src>

<mosaic_0001>
module attributes {stable_mosaic.version = 11 : i64} {
  func.func @_stride_last_two_kernel(%arg0: i32, %arg1: memref<16x8xf32, #tpu.memory_space<vmem>>, %arg2: memref<8x16x16xf32, #tpu.memory_space<vmem>>, %arg3: memref<8x8x8xf32, #tpu.memory_space<vmem>>) attributes {dimension_semantics = [#tpu.dimension_semantics<parallel>], iteration_bounds = array<i64: 1>, scalar_prefetch = 0 : i64, scratch_operands = 0 : i64, tpu.core_type = #tpu.core_type<tc>, window_params = [{pipeline_mode = #tpu.pipeline_mode<synchronous>, transform_indices = @transform_0, window_bounds = array<i64: 16, 8>}, {transform_indices = @transform_1, window_bounds = array<i64: 8, 16, 16>}, {transform_indices = @transform_2, window_bounds = array<i64: 8, 8, 8>}]} {
    %c0 = arith.constant 0 : index
    %c0_0 = arith.constant 0 : index
    %0 = vector.load %arg1[%c0, %c0_0] : memref<16x8xf32, #tpu.memory_space<vmem>>, vector<16x8xf32>
    %c0_1 = arith.constant 0 : index
    %c0_2 = arith.constant 0 : index
    %c0_3 = arith.constant 0 : index
    %1 = vector.load %arg2[%c0_1, %c0_2, %c0_3] : memref<8x16x16xf32, #tpu.memory_space<vmem>>, vector<8x1x16xf32>
    %2 = vector.shape_cast %1 : vector<8x1x16xf32> to vector<8x16xf32>
    %cst = arith.constant dense<0.000000e+00> : vector<8x8xf32>
    %3 = tpu.matmul %2, %0, %cst {dimension_numbers = #tpu.dot_dimension_numbers<[1], [0], [0], [1], [0, 0, 1, 1], [], []>} : vector<8x16xf32>, vector<16x8xf32>, vector<8x8xf32> -> vector<8x8xf32>
    %c0_4 = arith.constant 0 : index
    %c0_5 = arith.constant 0 : index
    %c0_6 = arith.constant 0 : index
    %4 = vector.load %arg3[%c0_4, %c0_5, %c0_6] : memref<8x8x8xf32, #tpu.memory_space<vmem>>, vector<8x1x8xf32>
    %5 = vector.shape_cast %4 : vector<8x1x8xf32> to vector<8x8xf32>
    %6 = vector.shape_cast %3 : vector<8x8xf32> to vector<8x1x8xf32>
    tpu.vector_store %arg3[%c0_4, %c0_5, %c0_6], %6 {strides = array<i32>} : memref<8x8x8xf32, #tpu.memory_space<vmem>>, vector<8x1x8xf32>,
    %c0_7 = arith.constant 0 : index
    %c2 = arith.constant 2 : index
    %c0_8 = arith.constant 0 : index
    %7 = vector.load %arg2[%c0_7, %c2, %c0_8] : memref<8x16x16xf32, #tpu.memory_space<vmem>>, vector<8x1x16xf32>
    %8 = vector.shape_cast %7 : vector<8x1x16xf32> to vector<8x16xf32>
    %cst_9 = arith.constant dense<0.000000e+00> : vector<8x8xf32>
    %9 = tpu.matmul %8, %0, %cst_9 {dimension_numbers = #tpu.dot_dimension_numbers<[1], [0], [0], [1], [0, 0, 1, 1], [], []>} : vector<8x16xf32>, vector<16x8xf32>, vector<8x8xf32> -> vector<8x8xf32>
    %c0_10 = arith.constant 0 : index
    %c1 = arith.constant 1 : index
    %c0_11 = arith.constant 0 : index
    %10 = vector.load %arg3[%c0_10, %c1, %c0_11] : memref<8x8x8xf32, #tpu.memory_space<vmem>>, vector<8x1x8xf32>
    %11 = vector.shape_cast %10 : vector<8x1x8xf32> to vector<8x8xf32>
    %12 = vector.shape_cast %9 : vector<8x8xf32> to vector<8x1x8xf32>
    tpu.vector_store %arg3[%c0_10, %c1, %c0_11], %12 {strides = array<i32>} : memref<8x8x8xf32, #tpu.memory_space<vmem>>, vector<8x1x8xf32>,
    %c0_12 = arith.constant 0 : index
    %c4 = arith.constant 4 : index
    %c0_13 = arith.constant 0 : index
    %13 = vector.load %arg2[%c0_12, %c4, %c0_13] : memref<8x16x16xf32, #tpu.memory_space<vmem>>, vector<8x1x16xf32>
    %14 = vector.shape_cast %13 : vector<8x1x16xf32> to vector<8x16xf32>
    %cst_14 = arith.constant dense<0.000000e+00> : vector<8x8xf32>
    %15 = tpu.matmul %14, %0, %cst_14 {dimension_numbers = #tpu.dot_dimension_numbers<[1], [0], [0], [1], [0, 0, 1, 1], [], []>} : vector<8x16xf32>, vector<16x8xf32>, vector<8x8xf32> -> vector<8x8xf32>
    %c0_15 = arith.constant 0 : index
    %c2_16 = arith.constant 2 : index
    %c0_17 = arith.constant 0 : index
    %16 = vector.load %arg3[%c0_15, %c2_16, %c0_17] : memref<8x8x8xf32, #tpu.memory_space<vmem>>, vector<8x1x8xf32>
    %17 = vector.shape_cast %16 : vector<8x1x8xf32> to vector<8x8xf32>
    %18 = vector.shape_cast %15 : vector<8x8xf32> to vector<8x1x8xf32>
    tpu.vector_store %arg3[%c0_15, %c2_16, %c0_17], %18 {strides = array<i32>} : memref<8x8x8xf32, #tpu.memory_space<vmem>>, vector<8x1x8xf32>,
    %c0_18 = arith.constant 0 : index
    %c6 = arith.constant 6 : index
    %c0_19 = arith.constant 0 : index
    %19 = vector.load %arg2[%c0_18, %c6, %c0_19] : memref<8x16x16xf32, #tpu.memory_space<vmem>>, vector<8x1x16xf32>
    %20 = vector.shape_cast %19 : vector<8x1x16xf32> to vector<8x16xf32>
    %cst_20 = arith.constant dense<0.000000e+00> : vector<8x8xf32>
    %21 = tpu.matmul %20, %0, %cst_20 {dimension_numbers = #tpu.dot_dimension_numbers<[1], [0], [0], [1], [0, 0, 1, 1], [], []>} : vector<8x16xf32>, vector<16x8xf32>, vector<8x8xf32> -> vector<8x8xf32>
    %c0_21 = arith.constant 0 : index
    %c3 = arith.constant 3 : index
    %c0_22 = arith.constant 0 : index
    %22 = vector.load %arg3[%c0_21, %c3, %c0_22] : memref<8x8x8xf32, #tpu.memory_space<vmem>>, vector<8x1x8xf32>
    %23 = vector.shape_cast %22 : vector<8x1x8xf32> to vector<8x8xf32>
    %24 = vector.shape_cast %21 : vector<8x8xf32> to vector<8x1x8xf32>
    tpu.vector_store %arg3[%c0_21, %c3, %c0_22], %24 {strides = array<i32>} : memref<8x8x8xf32, #tpu.memory_space<vmem>>, vector<8x1x8xf32>,
    %c0_23 = arith.constant 0 : index
    %c8 = arith.constant 8 : index
    %c0_24 = arith.constant 0 : index
    %25 = vector.load %arg2[%c0_23, %c8, %c0_24] : memref<8x16x16xf32, #tpu.memory_space<vmem>>, vector<8x1x16xf32>
    %26 = vector.shape_cast %25 : vector<8x1x16xf32> to vector<8x16xf32>
    %cst_25 = arith.constant dense<0.000000e+00> : vector<8x8xf32>
    %27 = tpu.matmul %26, %0, %cst_25 {dimension_numbers = #tpu.dot_dimension_numbers<[1], [0], [0], [1], [0, 0, 1, 1], [], []>} : vector<8x16xf32>, vector<16x8xf32>, vector<8x8xf32> -> vector<8x8xf32>
    %c0_26 = arith.constant 0 : index
    %c4_27 = arith.constant 4 : index
    %c0_28 = arith.constant 0 : index
    %28 = vector.load %arg3[%c0_26, %c4_27, %c0_28] : memref<8x8x8xf32, #tpu.memory_space<vmem>>, vector<8x1x8xf32>
    %29 = vector.shape_cast %28 : vector<8x1x8xf32> to vector<8x8xf32>
    %30 = vector.shape_cast %27 : vector<8x8xf32> to vector<8x1x8xf32>
    tpu.vector_store %arg3[%c0_26, %c4_27, %c0_28], %30 {strides = array<i32>} : memref<8x8x8xf32, #tpu.memory_space<vmem>>, vector<8x1x8xf32>,
    %c0_29 = arith.constant 0 : index
    %c10 = arith.constant 10 : index
    %c0_30 = arith.constant 0 : index
    %31 = vector.load %arg2[%c0_29, %c10, %c0_30] : memref<8x16x16xf32, #tpu.memory_space<vmem>>, vector<8x1x16xf32>
    %32 = vector.shape_cast %31 : vector<8x1x16xf32> to vector<8x16xf32>
    %cst_31 = arith.constant dense<0.000000e+00> : vector<8x8xf32>
    %33 = tpu.matmul %32, %0, %cst_31 {dimension_numbers = #tpu.dot_dimension_numbers<[1], [0], [0], [1], [0, 0, 1, 1], [], []>} : vector<8x16xf32>, vector<16x8xf32>, vector<8x8xf32> -> vector<8x8xf32>
    %c0_32 = arith.constant 0 : index
    %c5 = arith.constant 5 : index
    %c0_33 = arith.constant 0 : index
    %34 = vector.load %arg3[%c0_32, %c5, %c0_33] : memref<8x8x8xf32, #tpu.memory_space<vmem>>, vector<8x1x8xf32>
    %35 = vector.shape_cast %34 : vector<8x1x8xf32> to vector<8x8xf32>
    %36 = vector.shape_cast %33 : vector<8x8xf32> to vector<8x1x8xf32>
    tpu.vector_store %arg3[%c0_32, %c5, %c0_33], %36 {strides = array<i32>} : memref<8x8x8xf32, #tpu.memory_space<vmem>>, vector<8x1x8xf32>,
    %c0_34 = arith.constant 0 : index
    %c12 = arith.constant 12 : index
    %c0_35 = arith.constant 0 : index
    %37 = vector.load %arg2[%c0_34, %c12, %c0_35] : memref<8x16x16xf32, #tpu.memory_space<vmem>>, vector<8x1x16xf32>
    %38 = vector.shape_cast %37 : vector<8x1x16xf32> to vector<8x16xf32>
    %cst_36 = arith.constant dense<0.000000e+00> : vector<8x8xf32>
    %39 = tpu.matmul %38, %0, %cst_36 {dimension_numbers = #tpu.dot_dimension_numbers<[1], [0], [0], [1], [0, 0, 1, 1], [], []>} : vector<8x16xf32>, vector<16x8xf32>, vector<8x8xf32> -> vector<8x8xf32>
    %c0_37 = arith.constant 0 : index
    %c6_38 = arith.constant 6 : index
    %c0_39 = arith.constant 0 : index
    %40 = vector.load %arg3[%c0_37, %c6_38, %c0_39] : memref<8x8x8xf32, #tpu.memory_space<vmem>>, vector<8x1x8xf32>
    %41 = vector.shape_cast %40 : vector<8x1x8xf32> to vector<8x8xf32>
    %42 = vector.shape_cast %39 : vector<8x8xf32> to vector<8x1x8xf32>
    tpu.vector_store %arg3[%c0_37, %c6_38, %c0_39], %42 {strides = array<i32>} : memref<8x8x8xf32, #tpu.memory_space<vmem>>, vector<8x1x8xf32>,
    %c0_40 = arith.constant 0 : index
    %c14 = arith.constant 14 : index
    %c0_41 = arith.constant 0 : index
    %43 = vector.load %arg2[%c0_40, %c14, %c0_41] : memref<8x16x16xf32, #tpu.memory_space<vmem>>, vector<8x1x16xf32>
    %44 = vector.shape_cast %43 : vector<8x1x16xf32> to vector<8x16xf32>
    %cst_42 = arith.constant dense<0.000000e+00> : vector<8x8xf32>
    %45 = tpu.matmul %44, %0, %cst_42 {dimension_numbers = #tpu.dot_dimension_numbers<[1], [0], [0], [1], [0, 0, 1, 1], [], []>} : vector<8x16xf32>, vector<16x8xf32>, vector<8x8xf32> -> vector<8x8xf32>
    %c0_43 = arith.constant 0 : index
    %c7 = arith.constant 7 : index
    %c0_44 = arith.constant 0 : index
    %46 = vector.load %arg3[%c0_43, %c7, %c0_44] : memref<8x8x8xf32, #tpu.memory_space<vmem>>, vector<8x1x8xf32>
    %47 = vector.shape_cast %46 : vector<8x1x8xf32> to vector<8x8xf32>
    %48 = vector.shape_cast %45 : vector<8x8xf32> to vector<8x1x8xf32>
    tpu.vector_store %arg3[%c0_43, %c7, %c0_44], %48 {strides = array<i32>} : memref<8x8x8xf32, #tpu.memory_space<vmem>>, vector<8x1x8xf32>,
    return
  }
  func.func @transform_0(%arg0: i32) -> (i32, i32) {
    %c0_i32 = arith.constant 0 : i32
    %c0_i32_0 = arith.constant 0 : i32
    %c0_i32_1 = arith.constant 0 : i32
    return %c0_i32, %c0_i32_0 : i32, i32
  }
  func.func @transform_1(%arg0: i32) -> (i32, i32, i32) {
    %c0_i32 = arith.constant 0 : i32
    %c0_i32_0 = arith.constant 0 : i32
    %c0_i32_1 = arith.constant 0 : i32
    return %arg0, %c0_i32, %c0_i32_0 : i32, i32, i32
  }
  func.func @transform_2(%arg0: i32) -> (i32, i32, i32) {
    %c0_i32 = arith.constant 0 : i32
    %c0_i32_0 = arith.constant 0 : i32
    %c0_i32_1 = arith.constant 0 : i32
    return %arg0, %c0_i32, %c0_i32_0 : i32, i32, i32
  }
}

</mosaic_0001>

<llo_original>
// kernel: tpu_custom_call.1
$region0: #{tpu_custom_call.1}
  #allocation0 [shape = 'u32[]', space=smem, size = 0x4, offset = 0x4, fixed_abs, tag = 'smem constant byte address 0x4 - core index']
  #allocation1 [shape = 'u32[72,128]{1,0:T(1,128)}', space=vmem, size = 0x9000, scoped, tag = 'internal scratch']
  %s0 = inlined_call_operand.vmem [shape: f32[16,8], index: 0, kind: input, shape index: {}]
  %s1 = inlined_call_operand.hbm [shape: f32[8,16,16], index: 1, kind: input, shape index: {}]
  %s2 = inlined_call_operand.hbm [shape: f32[8,8,8], index: 2, kind: output, shape index: {}]
  %s3 = sld [smem:[#allocation0]]
  $region22: #{tpu_custom_call.1} parent=0
    _
  %s5 = ssub.s32 1, %s3
  %s6 = scalar_select 0, %s5, %s3
  $region1: #{tpu_custom_call.1} parent=0
    #allocation2 [shape = 'u8[65536]{0}', space=vmem, size = 0x10000, scoped, tag = 'input window, operand 1, single buffered']
    #allocation3 [shape = 's32[1]{0}', space=sflag, size = 0x4, scoped, tag = 'scoped memory for tpu_custom_call.1']
    #allocation4 [shape = 's32[1]{0}', space=sflag, size = 0x4, scoped, tag = 'scoped memory for tpu_custom_call.1']
    #allocation5 [shape = 'u8[32768]{0}', space=vmem, size = 0x8000, scoped, tag = 'output window, operand 0, single buffered']
    %7 = vsyncpa [#allocation3], 0
    %8 = vsyncpa [#allocation4], 0
    // Predicated region
    $region2: #{tpu_custom_call.1} parent=1 // pred_check
      _
    $region3: #{tpu_custom_call.1} parent=1 // pred_check_branch
      %10 = sbr.rel (0) target = $region5
    $region4: #{tpu_custom_call.1} parent=1 // pred_region
      _
    $region5: #{tpu_custom_call.1} parent=1 // pred_fallthru
      _
    // Predicated region
    $region6: #{tpu_custom_call.1} parent=1 // pred_check
      _
    $region7: #{tpu_custom_call.1} parent=1 // pred_check_branch
      %12 = sbr.rel (0) target = $region9
    $region8: #{tpu_custom_call.1} parent=1 // pred_region
      %14 = vsyncadd [#allocation3], 0
      %s15 = sshll.u32 %s1, 4
      %s16 = int_to_ptr.hbm [resolvable:$true] %s15
      %s17 = sshll.u32 [#allocation2], 4
      %s18 = int_to_ptr.vmem [resolvable:$true] %s17
      %23 = dma.hbm_to_vmem [thread:$0]  %s16, 2048, %s18, [#allocation3], 128, 128, 8
    $region9: #{tpu_custom_call.1} parent=1 // pred_fallthru
      _
    // Predicated region
    $region10: #{tpu_custom_call.1} parent=1 // pred_check
      _
    $region11: #{tpu_custom_call.1} parent=1 // pred_check_branch
      %25 = sbr.rel (0) target = $region13
    $region12: #{tpu_custom_call.1} parent=1 // pred_region
      %27 = dma.done [#allocation3], 2048
    $region13: #{tpu_custom_call.1} parent=1 // pred_fallthru
      _
    %v28 = vld [vmem:[%s0] sm:$0xff]
    %v29 = vld [vmem:[%s0 + $0x8] sm:$0xff]
    %v30 = vld [vmem:[#allocation2] sm:$0x1]
    %v31 = vld [vmem:[#allocation2 + $0x10] sm:$0x1]
    %v32 = vld [vmem:[#allocation2 + $0x20] sm:$0x1]
    %v33 = vld [vmem:[#allocation2 + $0x30] sm:$0x1]
    %v34 = vld [vmem:[#allocation2 + $0x40] sm:$0x1]
    %v35 = vld [vmem:[#allocation2 + $0x50] sm:$0x1]
    %v36 = vld [vmem:[#allocation2 + $0x60] sm:$0x1]
    %v37 = vld [vmem:[#allocation2 + $0x70] sm:$0x1]
    %v46 = vrot.slane %v31, 7
    %vm47 = vcmask 1041409
    %v48 = vsel %vm47, %v46, %v30
    %v49 = vrot.slane %v32, 6
    %vm50 = vcmask 1042434
    %v51 = vsel %vm50, %v49, %v48
    %v52 = vrot.slane %v33, 5
    %vm53 = vcmask 1043459
    %v54 = vsel %vm53, %v52, %v51
    %v55 = vrot.slane %v34, 4
    %vm56 = vcmask 1044484
    %v57 = vsel %vm56, %v55, %v54
    %v58 = vrot.slane %v35, 3
    %vm59 = vcmask 1045509
    %v60 = vsel %vm59, %v58, %v57
    %v61 = vrot.slane %v36, 2
    %vm62 = vcmask 1046534
    %v63 = vsel %vm62, %v61, %v60
    %v64 = vrot.slane %v37, 1
    %vm65 = vcmask 1047559
    %v66 = vsel %vm65, %v64, %v63
    %vm67 = vcmask 130048
    %v68 = vsel %vm67, %v66, 0
    %70 = vmatpush.msra.mxu0 0.0
    %71 = vmatpush.msra.mxu0 0.0
    %72 = vmatpush.msra.mxu0 0.0
    %73 = vmatpush.msra.mxu0 0.0
    %74 = vmatpush.msra.mxu0 0.0
    %75 = vmatpush.msra.mxu0 0.0
    %76 = vmatpush.msra.mxu0 0.0
    %77 = vmatpush.msra.mxu0 0.0
    %78 = vmatpush.msra.mxu0 0.0
    %79 = vmatpush.msra.mxu0 0.0
    %80 = vmatpush.msra.mxu0 0.0
    %81 = vmatpush.msra.mxu0 0.0
    %82 = vmatpush.msra.mxu0 0.0
    %83 = vmatpush.msra.mxu0 0.0
    %84 = vmatpush.msra.mxu0 %v29
    %85 = vmatpush.msra.mxu0 %v28
    %86 = vmatmul.f32.gmra.mxu0 %v68
    %v87 = vpop.f32.mrf.mxu0
    %v88 = vadd.f32 0.0, %v87
    %89 = vdwg.mxu0
    %v91 = vrot.slane %v88, 1
    %v92 = vrot.slane %v88, 2
    %v93 = vrot.slane %v88, 3
    %v94 = vrot.slane %v88, 4
    %v95 = vrot.slane %v88, 5
    %v96 = vrot.slane %v88, 6
    %v97 = vrot.slane %v88, 7
    %vm105 = vcmask 57344
    %106 = vst.msk [vmem:[#allocation5] sm:$0x1] %vm105, %v88
    %107 = vst.msk [vmem:[#allocation5 + $0x8] sm:$0x1] %vm105, %v91
    %108 = vst.msk [vmem:[#allocation5 + $0x10] sm:$0x1] %vm105, %v92
    %109 = vst.msk [vmem:[#allocation5 + $0x18] sm:$0x1] %vm105, %v93
    %110 = vst.msk [vmem:[#allocation5 + $0x20] sm:$0x1] %vm105, %v94
    %111 = vst.msk [vmem:[#allocation5 + $0x28] sm:$0x1] %vm105, %v95
    %112 = vst.msk [vmem:[#allocation5 + $0x30] sm:$0x1] %vm105, %v96
    %113 = vst.msk [vmem:[#allocation5 + $0x38] sm:$0x1] %vm105, %v97
    %v114 = vld [vmem:[#allocation2 + $0x2] sm:$0x1]
    %v115 = vld [vmem:[#allocation2 + $0x12] sm:$0x1]
    %v116 = vld [vmem:[#allocation2 + $0x22] sm:$0x1]
    %v117 = vld [vmem:[#allocation2 + $0x32] sm:$0x1]
    %v118 = vld [vmem:[#allocation2 + $0x42] sm:$0x1]
    %v119 = vld [vmem:[#allocation2 + $0x52] sm:$0x1]
    %v120 = vld [vmem:[#allocation2 + $0x62] sm:$0x1]
    %v121 = vld [vmem:[#allocation2 + $0x72] sm:$0x1]
    %v130 = vrot.slane %v115, 7
    %v131 = vsel %vm47, %v130, %v114
    %v132 = vrot.slane %v116, 6
    %v133 = vsel %vm50, %v132, %v131
    %v134 = vrot.slane %v117, 5
    %v135 = vsel %vm53, %v134, %v133
    %v136 = vrot.slane %v118, 4
    %v137 = vsel %vm56, %v136, %v135
    %v138 = vrot.slane %v119, 3
    %v139 = vsel %vm59, %v138, %v137
    %v140 = vrot.slane %v120, 2
    %v141 = vsel %vm62, %v140, %v139
    %v142 = vrot.slane %v121, 1
    %v143 = vsel %vm65, %v142, %v141
    %v144 = vsel %vm67, %v143, 0
    %146 = vmatpush.msra.mxu0 0.0
    %147 = vmatpush.msra.mxu0 0.0
    %148 = vmatpush.msra.mxu0 0.0
    %149 = vmatpush.msra.mxu0 0.0
    %150 = vmatpush.msra.mxu0 0.0
    %151 = vmatpush.msra.mxu0 0.0
    %152 = vmatpush.msra.mxu0 0.0
    %153 = vmatpush.msra.mxu0 0.0
    %154 = vmatpush.msra.mxu0 0.0
    %155 = vmatpush.msra.mxu0 0.0
    %156 = vmatpush.msra.mxu0 0.0
    %157 = vmatpush.msra.mxu0 0.0
    %158 = vmatpush.msra.mxu0 0.0
    %159 = vmatpush.msra.mxu0 0.0
    %160 = vmatpush.msra.mxu0 %v29
    %161 = vmatpush.msra.mxu0 %v28
    %162 = vmatmul.f32.gmra.mxu0 %v144
    %v163 = vpop.f32.mrf.mxu0
    %v164 = vadd.f32 0.0, %v163
    %165 = vdwg.mxu0
    %v167 = vrot.slane %v164, 1
    %v168 = vrot.slane %v164, 2
    %v169 = vrot.slane %v164, 3
    %v170 = vrot.slane %v164, 4
    %v171 = vrot.slane %v164, 5
    %v172 = vrot.slane %v164, 6
    %v173 = vrot.slane %v164, 7
    %181 = vst.msk [vmem:[#allocation5 + $0x1] sm:$0x1] %vm105, %v164
    %182 = vst.msk [vmem:[#allocation5 + $0x9] sm:$0x1] %vm105, %v167
    %183 = vst.msk [vmem:[#allocation5 + $0x11] sm:$0x1] %vm105, %v168
    %184 = vst.msk [vmem:[#allocation5 + $0x19] sm:$0x1] %vm105, %v169
    %185 = vst.msk [vmem:[#allocation5 + $0x21] sm:$0x1] %vm105, %v170
    %186 = vst.msk [vmem:[#allocation5 + $0x29] sm:$0x1] %vm105, %v171
    %187 = vst.msk [vmem:[#allocation5 + $0x31] sm:$0x1] %vm105, %v172
    %188 = vst.msk [vmem:[#allocation5 + $0x39] sm:$0x1] %vm105, %v173
    %v189 = vld [vmem:[#allocation2 + $0x4] sm:$0x1]
    %v190 = vld [vmem:[#allocation2 + $0x14] sm:$0x1]
    %v191 = vld [vmem:[#allocation2 + $0x24] sm:$0x1]
    %v192 = vld [vmem:[#allocation2 + $0x34] sm:$0x1]
    %v193 = vld [vmem:[#allocation2 + $0x44] sm:$0x1]
    %v194 = vld [vmem:[#allocation2 + $0x54] sm:$0x1]
    %v195 = vld [vmem:[#allocation2 + $0x64] sm:$0x1]
    %v196 = vld [vmem:[#allocation2 + $0x74] sm:$0x1]
    %v205 = vrot.slane %v190, 7
    %v206 = vsel %vm47, %v205, %v189
    %v207 = vrot.slane %v191, 6
    %v208 = vsel %vm50, %v207, %v206
    %v209 = vrot.slane %v192, 5
    %v210 = vsel %vm53, %v209, %v208
    %v211 = vrot.slane %v193, 4
    %v212 = vsel %vm56, %v211, %v210
    %v213 = vrot.slane %v194, 3
    %v214 = vsel %vm59, %v213, %v212
    %v215 = vrot.slane %v195, 2
    %v216 = vsel %vm62, %v215, %v214
    %v217 = vrot.slane %v196, 1
    %v218 = vsel %vm65, %v217, %v216
    %v219 = vsel %vm67, %v218, 0
    %221 = vmatpush.msra.mxu0 0.0
    %222 = vmatpush.msra.mxu0 0.0
    %223 = vmatpush.msra.mxu0 0.0
    %224 = vmatpush.msra.mxu0 0.0
    %225 = vmatpush.msra.mxu0 0.0
    %226 = vmatpush.msra.mxu0 0.0
    %227 = vmatpush.msra.mxu0 0.0
    %228 = vmatpush.msra.mxu0 0.0
    %229 = vmatpush.msra.mxu0 0.0
    %230 = vmatpush.msra.mxu0 0.0
    %231 = vmatpush.msra.mxu0 0.0
    %232 = vmatpush.msra.mxu0 0.0
    %233 = vmatpush.msra.mxu0 0.0
    %234 = vmatpush.msra.mxu0 0.0
    %235 = vmatpush.msra.mxu0 %v29
    %236 = vmatpush.msra.mxu0 %v28
    %237 = vmatmul.f32.gmra.mxu0 %v219
    %v238 = vpop.f32.mrf.mxu0
    %v239 = vadd.f32 0.0, %v238
    %240 = vdwg.mxu0
    %v242 = vrot.slane %v239, 1
    %v243 = vrot.slane %v239, 2
    %v244 = vrot.slane %v239, 3
    %v245 = vrot.slane %v239, 4
    %v246 = vrot.slane %v239, 5
    %v247 = vrot.slane %v239, 6
    %v248 = vrot.slane %v239, 7
    %256 = vst.msk [vmem:[#allocation5 + $0x2] sm:$0x1] %vm105, %v239
    %257 = vst.msk [vmem:[#allocation5 + $0xa] sm:$0x1] %vm105, %v242
    %258 = vst.msk [vmem:[#allocation5 + $0x12] sm:$0x1] %vm105, %v243
    %259 = vst.msk [vmem:[#allocation5 + $0x1a] sm:$0x1] %vm105, %v244
    %260 = vst.msk [vmem:[#allocation5 + $0x22] sm:$0x1] %vm105, %v245
    %261 = vst.msk [vmem:[#allocation5 + $0x2a] sm:$0x1] %vm105, %v246
    %262 = vst.msk [vmem:[#allocation5 + $0x32] sm:$0x1] %vm105, %v247
    %263 = vst.msk [vmem:[#allocation5 + $0x3a] sm:$0x1] %vm105, %v248
    %v264 = vld [vmem:[#allocation2 + $0x6] sm:$0x1]
    %v265 = vld [vmem:[#allocation2 + $0x16] sm:$0x1]
    %v266 = vld [vmem:[#allocation2 + $0x26] sm:$0x1]
    %v267 = vld [vmem:[#allocation2 + $0x36] sm:$0x1]
    %v268 = vld [vmem:[#allocation2 + $0x46] sm:$0x1]
    %v269 = vld [vmem:[#allocation2 + $0x56] sm:$0x1]
    %v270 = vld [vmem:[#allocation2 + $0x66] sm:$0x1]
    %v271 = vld [vmem:[#allocation2 + $0x76] sm:$0x1]
    %v280 = vrot.slane %v265, 7
    %v281 = vsel %vm47, %v280, %v264
    %v282 = vrot.slane %v266, 6
    %v283 = vsel %vm50, %v282, %v281
    %v284 = vrot.slane %v267, 5
    %v285 = vsel %vm53, %v284, %v283
    %v286 = vrot.slane %v268, 4
    %v287 = vsel %vm56, %v286, %v285
    %v288 = vrot.slane %v269, 3
    %v289 = vsel %vm59, %v288, %v287
    %v290 = vrot.slane %v270, 2
    %v291 = vsel %vm62, %v290, %v289
    %v292 = vrot.slane %v271, 1
    %v293 = vsel %vm65, %v292, %v291
    %v294 = vsel %vm67, %v293, 0
    %296 = vmatpush.msra.mxu0 0.0
    %297 = vmatpush.msra.mxu0 0.0
    %298 = vmatpush.msra.mxu0 0.0
    %299 = vmatpush.msra.mxu0 0.0
    %300 = vmatpush.msra.mxu0 0.0
    %301 = vmatpush.msra.mxu0 0.0
    %302 = vmatpush.msra.mxu0 0.0
    %303 = vmatpush.msra.mxu0 0.0
    %304 = vmatpush.msra.mxu0 0.0
    %305 = vmatpush.msra.mxu0 0.0
    %306 = vmatpush.msra.mxu0 0.0
    %307 = vmatpush.msra.mxu0 0.0
    %308 = vmatpush.msra.mxu0 0.0
    %309 = vmatpush.msra.mxu0 0.0
    %310 = vmatpush.msra.mxu0 %v29
    %311 = vmatpush.msra.mxu0 %v28
    %312 = vmatmul.f32.gmra.mxu0 %v294
    %v313 = vpop.f32.mrf.mxu0
    %v314 = vadd.f32 0.0, %v313
    %315 = vdwg.mxu0
    %v317 = vrot.slane %v314, 1
    %v318 = vrot.slane %v314, 2
    %v319 = vrot.slane %v314, 3
    %v320 = vrot.slane %v314, 4
    %v321 = vrot.slane %v314, 5
    %v322 = vrot.slane %v314, 6
    %v323 = vrot.slane %v314, 7
    %331 = vst.msk [vmem:[#allocation5 + $0x3] sm:$0x1] %vm105, %v314
    %332 = vst.msk [vmem:[#allocation5 + $0xb] sm:$0x1] %vm105, %v317
    %333 = vst.msk [vmem:[#allocation5 + $0x13] sm:$0x1] %vm105, %v318
    %334 = vst.msk [vmem:[#allocation5 + $0x1b] sm:$0x1] %vm105, %v319
    %335 = vst.msk [vmem:[#allocation5 + $0x23] sm:$0x1] %vm105, %v320
    %336 = vst.msk [vmem:[#allocation5 + $0x2b] sm:$0x1] %vm105, %v321
    %337 = vst.msk [vmem:[#allocation5 + $0x33] sm:$0x1] %vm105, %v322
    %338 = vst.msk [vmem:[#allocation5 + $0x3b] sm:$0x1] %vm105, %v323
    %v339 = vld [vmem:[#allocation2 + $0x8] sm:$0x1]
    %v340 = vld [vmem:[#allocation2 + $0x18] sm:$0x1]
    %v341 = vld [vmem:[#allocation2 + $0x28] sm:$0x1]
    %v342 = vld [vmem:[#allocation2 + $0x38] sm:$0x1]
    %v343 = vld [vmem:[#allocation2 + $0x48] sm:$0x1]
    %v344 = vld [vmem:[#allocation2 + $0x58] sm:$0x1]
    %v345 = vld [vmem:[#allocation2 + $0x68] sm:$0x1]
    %v346 = vld [vmem:[#allocation2 + $0x78] sm:$0x1]
    %v355 = vrot.slane %v340, 7
    %v356 = vsel %vm47, %v355, %v339
    %v357 = vrot.slane %v341, 6
    %v358 = vsel %vm50, %v357, %v356
    %v359 = vrot.slane %v342, 5
    %v360 = vsel %vm53, %v359, %v358
    %v361 = vrot.slane %v343, 4
    %v362 = vsel %vm56, %v361, %v360
    %v363 = vrot.slane %v344, 3
    %v364 = vsel %vm59, %v363, %v362
    %v365 = vrot.slane %v345, 2
    %v366 = vsel %vm62, %v365, %v364
    %v367 = vrot.slane %v346, 1
    %v368 = vsel %vm65, %v367, %v366
    %v369 = vsel %vm67, %v368, 0
    %371 = vmatpush.msra.mxu0 0.0
    %372 = vmatpush.msra.mxu0 0.0
    %373 = vmatpush.msra.mxu0 0.0
    %374 = vmatpush.msra.mxu0 0.0
    %375 = vmatpush.msra.mxu0 0.0
    %376 = vmatpush.msra.mxu0 0.0
    %377 = vmatpush.msra.mxu0 0.0
    %378 = vmatpush.msra.mxu0 0.0
    %379 = vmatpush.msra.mxu0 0.0
    %380 = vmatpush.msra.mxu0 0.0
    %381 = vmatpush.msra.mxu0 0.0
    %382 = vmatpush.msra.mxu0 0.0
    %383 = vmatpush.msra.mxu0 0.0
    %384 = vmatpush.msra.mxu0 0.0
    %385 = vmatpush.msra.mxu0 %v29
    %386 = vmatpush.msra.mxu0 %v28
    %387 = vmatmul.f32.gmra.mxu0 %v369
    %v388 = vpop.f32.mrf.mxu0
    %v389 = vadd.f32 0.0, %v388
    %390 = vdwg.mxu0
    %v392 = vrot.slane %v389, 1
    %v393 = vrot.slane %v389, 2
    %v394 = vrot.slane %v389, 3
    %v395 = vrot.slane %v389, 4
    %v396 = vrot.slane %v389, 5
    %v397 = vrot.slane %v389, 6
    %v398 = vrot.slane %v389, 7
    %406 = vst.msk [vmem:[#allocation5 + $0x4] sm:$0x1] %vm105, %v389
    %407 = vst.msk [vmem:[#allocation5 + $0xc] sm:$0x1] %vm105, %v392
    %408 = vst.msk [vmem:[#allocation5 + $0x14] sm:$0x1] %vm105, %v393
    %409 = vst.msk [vmem:[#allocation5 + $0x1c] sm:$0x1] %vm105, %v394
    %410 = vst.msk [vmem:[#allocation5 + $0x24] sm:$0x1] %vm105, %v395
    %411 = vst.msk [vmem:[#allocation5 + $0x2c] sm:$0x1] %vm105, %v396
    %412 = vst.msk [vmem:[#allocation5 + $0x34] sm:$0x1] %vm105, %v397
    %413 = vst.msk [vmem:[#allocation5 + $0x3c] sm:$0x1] %vm105, %v398
    %v414 = vld [vmem:[#allocation2 + $0xa] sm:$0x1]
    %v415 = vld [vmem:[#allocation2 + $0x1a] sm:$0x1]
    %v416 = vld [vmem:[#allocation2 + $0x2a] sm:$0x1]
    %v417 = vld [vmem:[#allocation2 + $0x3a] sm:$0x1]
    %v418 = vld [vmem:[#allocation2 + $0x4a] sm:$0x1]
    %v419 = vld [vmem:[#allocation2 + $0x5a] sm:$0x1]
    %v420 = vld [vmem:[#allocation2 + $0x6a] sm:$0x1]
    %v421 = vld [vmem:[#allocation2 + $0x7a] sm:$0x1]
    %v430 = vrot.slane %v415, 7
    %v431 = vsel %vm47, %v430, %v414
    %v432 = vrot.slane %v416, 6
    %v433 = vsel %vm50, %v432, %v431
    %v434 = vrot.slane %v417, 5
    %v435 = vsel %vm53, %v434, %v433
    %v436 = vrot.slane %v418, 4
    %v437 = vsel %vm56, %v436, %v435
    %v438 = vrot.slane %v419, 3
    %v439 = vsel %vm59, %v438, %v437
    %v440 = vrot.slane %v420, 2
    %v441 = vsel %vm62, %v440, %v439
    %v442 = vrot.slane %v421, 1
    %v443 = vsel %vm65, %v442, %v441
    %v444 = vsel %vm67, %v443, 0
    %446 = vmatpush.msra.mxu0 0.0
    %447 = vmatpush.msra.mxu0 0.0
    %448 = vmatpush.msra.mxu0 0.0
    %449 = vmatpush.msra.mxu0 0.0
    %450 = vmatpush.msra.mxu0 0.0
    %451 = vmatpush.msra.mxu0 0.0
    %452 = vmatpush.msra.mxu0 0.0
    %453 = vmatpush.msra.mxu0 0.0
    %454 = vmatpush.msra.mxu0 0.0
    %455 = vmatpush.msra.mxu0 0.0
    %456 = vmatpush.msra.mxu0 0.0
    %457 = vmatpush.msra.mxu0 0.0
    %458 = vmatpush.msra.mxu0 0.0
    %459 = vmatpush.msra.mxu0 0.0
    %460 = vmatpush.msra.mxu0 %v29
    %461 = vmatpush.msra.mxu0 %v28
    %462 = vmatmul.f32.gmra.mxu0 %v444
    %v463 = vpop.f32.mrf.mxu0
    %v464 = vadd.f32 0.0, %v463
    %465 = vdwg.mxu0
    %v467 = vrot.slane %v464, 1
    %v468 = vrot.slane %v464, 2
    %v469 = vrot.slane %v464, 3
    %v470 = vrot.slane %v464, 4
    %v471 = vrot.slane %v464, 5
    %v472 = vrot.slane %v464, 6
    %v473 = vrot.slane %v464, 7
    %481 = vst.msk [vmem:[#allocation5 + $0x5] sm:$0x1] %vm105, %v464
    %482 = vst.msk [vmem:[#allocation5 + $0xd] sm:$0x1] %vm105, %v467
    %483 = vst.msk [vmem:[#allocation5 + $0x15] sm:$0x1] %vm105, %v468
    %484 = vst.msk [vmem:[#allocation5 + $0x1d] sm:$0x1] %vm105, %v469
    %485 = vst.msk [vmem:[#allocation5 + $0x25] sm:$0x1] %vm105, %v470
    %486 = vst.msk [vmem:[#allocation5 + $0x2d] sm:$0x1] %vm105, %v471
    %487 = vst.msk [vmem:[#allocation5 + $0x35] sm:$0x1] %vm105, %v472
    %488 = vst.msk [vmem:[#allocation5 + $0x3d] sm:$0x1] %vm105, %v473
    %v489 = vld [vmem:[#allocation2 + $0xc] sm:$0x1]
    %v490 = vld [vmem:[#allocation2 + $0x1c] sm:$0x1]
    %v491 = vld [vmem:[#allocation2 + $0x2c] sm:$0x1]
    %v492 = vld [vmem:[#allocation2 + $0x3c] sm:$0x1]
    %v493 = vld [vmem:[#allocation2 + $0x4c] sm:$0x1]
    %v494 = vld [vmem:[#allocation2 + $0x5c] sm:$0x1]
    %v495 = vld [vmem:[#allocation2 + $0x6c] sm:$0x1]
    %v496 = vld [vmem:[#allocation2 + $0x7c] sm:$0x1]
    %v505 = vrot.slane %v490, 7
    %v506 = vsel %vm47, %v505, %v489
    %v507 = vrot.slane %v491, 6
    %v508 = vsel %vm50, %v507, %v506
    %v509 = vrot.slane %v492, 5
    %v510 = vsel %vm53, %v509, %v508
    %v511 = vrot.slane %v493, 4
    %v512 = vsel %vm56, %v511, %v510
    %v513 = vrot.slane %v494, 3
    %v514 = vsel %vm59, %v513, %v512
    %v515 = vrot.slane %v495, 2
    %v516 = vsel %vm62, %v515, %v514
    %v517 = vrot.slane %v496, 1
    %v518 = vsel %vm65, %v517, %v516
    %v519 = vsel %vm67, %v518, 0
    %521 = vmatpush.msra.mxu0 0.0
    %522 = vmatpush.msra.mxu0 0.0
    %523 = vmatpush.msra.mxu0 0.0
    %524 = vmatpush.msra.mxu0 0.0
    %525 = vmatpush.msra.mxu0 0.0
    %526 = vmatpush.msra.mxu0 0.0
    %527 = vmatpush.msra.mxu0 0.0
    %528 = vmatpush.msra.mxu0 0.0
    %529 = vmatpush.msra.mxu0 0.0
    %530 = vmatpush.msra.mxu0 0.0
    %531 = vmatpush.msra.mxu0 0.0
    %532 = vmatpush.msra.mxu0 0.0
    %533 = vmatpush.msra.mxu0 0.0
    %534 = vmatpush.msra.mxu0 0.0
    %535 = vmatpush.msra.mxu0 %v29
    %536 = vmatpush.msra.mxu0 %v28
    %537 = vmatmul.f32.gmra.mxu0 %v519
    %v538 = vpop.f32.mrf.mxu0
    %v539 = vadd.f32 0.0, %v538
    %540 = vdwg.mxu0
    %v542 = vrot.slane %v539, 1
    %v543 = vrot.slane %v539, 2
    %v544 = vrot.slane %v539, 3
    %v545 = vrot.slane %v539, 4
    %v546 = vrot.slane %v539, 5
    %v547 = vrot.slane %v539, 6
    %v548 = vrot.slane %v539, 7
    %556 = vst.msk [vmem:[#allocation5 + $0x6] sm:$0x1] %vm105, %v539
    %557 = vst.msk [vmem:[#allocation5 + $0xe] sm:$0x1] %vm105, %v542
    %558 = vst.msk [vmem:[#allocation5 + $0x16] sm:$0x1] %vm105, %v543
    %559 = vst.msk [vmem:[#allocation5 + $0x1e] sm:$0x1] %vm105, %v544
    %560 = vst.msk [vmem:[#allocation5 + $0x26] sm:$0x1] %vm105, %v545
    %561 = vst.msk [vmem:[#allocation5 + $0x2e] sm:$0x1] %vm105, %v546
    %562 = vst.msk [vmem:[#allocation5 + $0x36] sm:$0x1] %vm105, %v547
    %563 = vst.msk [vmem:[#allocation5 + $0x3e] sm:$0x1] %vm105, %v548
    %v564 = vld [vmem:[#allocation2 + $0xe] sm:$0x1]
    %v565 = vld [vmem:[#allocation2 + $0x1e] sm:$0x1]
    %v566 = vld [vmem:[#allocation2 + $0x2e] sm:$0x1]
    %v567 = vld [vmem:[#allocation2 + $0x3e] sm:$0x1]
    %v568 = vld [vmem:[#allocation2 + $0x4e] sm:$0x1]
    %v569 = vld [vmem:[#allocation2 + $0x5e] sm:$0x1]
    %v570 = vld [vmem:[#allocation2 + $0x6e] sm:$0x1]
    %v571 = vld [vmem:[#allocation2 + $0x7e] sm:$0x1]
    %v580 = vrot.slane %v565, 7
    %v581 = vsel %vm47, %v580, %v564
    %v582 = vrot.slane %v566, 6
    %v583 = vsel %vm50, %v582, %v581
    %v584 = vrot.slane %v567, 5
    %v585 = vsel %vm53, %v584, %v583
    %v586 = vrot.slane %v568, 4
    %v587 = vsel %vm56, %v586, %v585
    %v588 = vrot.slane %v569, 3
    %v589 = vsel %vm59, %v588, %v587
    %v590 = vrot.slane %v570, 2
    %v591 = vsel %vm62, %v590, %v589
    %v592 = vrot.slane %v571, 1
    %v593 = vsel %vm65, %v592, %v591
    %v594 = vsel %vm67, %v593, 0
    %596 = vmatpush.msra.mxu0 0.0
    %597 = vmatpush.msra.mxu0 0.0
    %598 = vmatpush.msra.mxu0 0.0
    %599 = vmatpush.msra.mxu0 0.0
    %600 = vmatpush.msra.mxu0 0.0
    %601 = vmatpush.msra.mxu0 0.0
    %602 = vmatpush.msra.mxu0 0.0
    %603 = vmatpush.msra.mxu0 0.0
    %604 = vmatpush.msra.mxu0 0.0
    %605 = vmatpush.msra.mxu0 0.0
    %606 = vmatpush.msra.mxu0 0.0
    %607 = vmatpush.msra.mxu0 0.0
    %608 = vmatpush.msra.mxu0 0.0
    %609 = vmatpush.msra.mxu0 0.0
    %610 = vmatpush.msra.mxu0 %v29
    %611 = vmatpush.msra.mxu0 %v28
    %612 = vmatmul.f32.gmra.mxu0 %v594
    %v613 = vpop.f32.mrf.mxu0
    %v614 = vadd.f32 0.0, %v613
    %615 = vdwg.mxu0
    %v617 = vrot.slane %v614, 1
    %v618 = vrot.slane %v614, 2
    %v619 = vrot.slane %v614, 3
    %v620 = vrot.slane %v614, 4
    %v621 = vrot.slane %v614, 5
    %v622 = vrot.slane %v614, 6
    %v623 = vrot.slane %v614, 7
    %631 = vst.msk [vmem:[#allocation5 + $0x7] sm:$0x1] %vm105, %v614
    %632 = vst.msk [vmem:[#allocation5 + $0xf] sm:$0x1] %vm105, %v617
    %633 = vst.msk [vmem:[#allocation5 + $0x17] sm:$0x1] %vm105, %v618
    %634 = vst.msk [vmem:[#allocation5 + $0x1f] sm:$0x1] %vm105, %v619
    %635 = vst.msk [vmem:[#allocation5 + $0x27] sm:$0x1] %vm105, %v620
    %636 = vst.msk [vmem:[#allocation5 + $0x2f] sm:$0x1] %vm105, %v621
    %637 = vst.msk [vmem:[#allocation5 + $0x37] sm:$0x1] %vm105, %v622
    %638 = vst.msk [vmem:[#allocation5 + $0x3f] sm:$0x1] %vm105, %v623
    // Predicated region
    $region14: #{tpu_custom_call.1} parent=1 // pred_check
      _
    $region15: #{tpu_custom_call.1} parent=1 // pred_check_branch
      %640 = sbr.rel (0) target = $region17
    $region16: #{tpu_custom_call.1} parent=1 // pred_region
      %642 = vsyncadd [#allocation4], 0
      %s643 = sshll.u32 [#allocation5], 4
      %s644 = int_to_ptr.vmem [resolvable:$true] %s643
      %s645 = sshll.u32 %s2, 4
      %s646 = int_to_ptr.hbm [resolvable:$true] %s645
      %651 = dma.vmem_to_hbm [thread:$0]  %s644, 1024, %s646, [#allocation4], 128, 128, 8
    $region17: #{tpu_custom_call.1} parent=1 // pred_fallthru
      _
    // Predicated region
    $region18: #{tpu_custom_call.1} parent=1 // pred_check
      _
    $region19: #{tpu_custom_call.1} parent=1 // pred_check_branch
      %653 = sbr.rel (0) target = $region21
    $region20: #{tpu_custom_call.1} parent=1 // pred_region
      %655 = dma.done [#allocation4], 1024
    $region21: #{tpu_custom_call.1} parent=1 // pred_fallthru
      _
    %656 = vsyncpa [#allocation3], 1
    %657 = vsyncpa [#allocation4], 1

</llo_original>
